<compile_context>
chip_gen: v7x
topology: tpu7x:2x2x1
jax: 0.10.0
libtpu: 0.0.40
codegen_flags: <defaults>
</compile_context>

<pallas_src>
import functools

import jax
import jax.numpy as jnp
from jax import lax
from jax.experimental import pallas as pl
from jax.experimental.pallas import tpu as pltpu


def _bn_kernel(x_ref, pb_ref, o_ref, *, eps):
    # x_ref: (M, TC)  -- M = N*H*W rows on sublanes, channels on lanes.
    # pb_ref: (2, TC) -- row 0 = gamma, row 1 = beta (lane-dense).
    x = x_ref[...].astype(jnp.float32)
    m = x.shape[0]
    inv_m = 1.0 / float(m)

    # Two-pass statistics (numerically stable vs E[x^2] - E[x]^2).
    mean = jnp.sum(x, axis=0, keepdims=True) * inv_m          # (1, TC)
    xc = x - mean                                             # (M, TC)
    var = jnp.sum(xc * xc, axis=0, keepdims=True) * inv_m     # (1, TC)
    inv_std = lax.rsqrt(var + eps)                            # (1, TC)

    gamma = pb_ref[0:1, :].astype(jnp.float32)                # (1, TC)
    beta = pb_ref[1:2, :].astype(jnp.float32)                 # (1, TC)

    # Normalize + affine: one broadcasted FMA on the centered values.
    scale = inv_std * gamma                                   # (1, TC)
    o_ref[...] = (xc * scale + beta).astype(o_ref.dtype)


def batchnorm2d_train(x_nchw, gamma, beta, *, eps=1e-3, tc=1920):
    """Training-mode BatchNorm2d forward (batch statistics), NCHW in/out.

    Internally runs on a lane-dense (N*H*W, C) view so channels sit on the
    128-lane axis; the NCHW<->NHWC shuffles live in the thin XLA wrapper.
    """
    n, c, h, w = x_nchw.shape
    hw = h * w
    m = n * hw
    tc = min(tc, c)
    # Channel tile must evenly divide C and be a multiple of 128 (lane tile).
    assert c % tc == 0 and tc % 128 == 0, "unsupported channel tile"

    # NCHW -> (N*H*W, C): channels become the (fast) lane axis.
    x2d = jnp.transpose(x_nchw.reshape(n, c, hw), (0, 2, 1)).reshape(m, c)
    # Lane-dense parameter pack: one contiguous (2, C) array.
    params = jnp.stack([gamma, beta], axis=0).astype(x_nchw.dtype)

    out2d = pl.pallas_call(
        functools.partial(_bn_kernel, eps=eps),
        out_shape=jax.ShapeDtypeStruct((m, c), x_nchw.dtype),
        grid_spec=pltpu.PrefetchScalarGridSpec(
            num_scalar_prefetch=0,
            grid=(c // tc,),
            in_specs=[
                pl.BlockSpec((m, tc), lambda j: (0, j)),
                pl.BlockSpec((2, tc), lambda j: (0, j)),
            ],
            out_specs=pl.BlockSpec((m, tc), lambda j: (0, j)),
        ),
        compiler_params=pltpu.CompilerParams(
            # grid=(2,) parallel -> one channel half per v7x TensorCore;
            # harmless on single-TC v5e/v6e.
            dimension_semantics=("parallel",),
            # Real usage is ~2 MiB (double-buffered (56,1920) f32 in/out plus
            # a 60 KiB param block); keep the reservation small so XLA can
            # overlap neighbouring work, with generous headroom.
            vmem_limit_bytes=12 * 1024 * 1024,
        ),
    )(x2d, params)

    # (N*H*W, C) -> NCHW.
    return jnp.transpose(out2d.reshape(n, hw, c), (0, 2, 1)).reshape(n, c, h, w)


def batchnorm2d_ref(x_nchw, gamma, beta, *, eps=1e-3):
    """Pure-JAX reference (training-mode BN over (N, H, W) per channel)."""
    x = x_nchw.astype(jnp.float32)
    mean = jnp.mean(x, axis=(0, 2, 3), keepdims=True)
    var = jnp.mean((x - mean) ** 2, axis=(0, 2, 3), keepdims=True)
    g = gamma.reshape(1, -1, 1, 1)
    b = beta.reshape(1, -1, 1, 1)
    return ((x - mean) * lax.rsqrt(var + eps) * g + b).astype(x_nchw.dtype)


if __name__ == "__main__":
    # Module implies input (1, 3840, 7, 7); keep the original shape.
    N, C, H, W = 1, 3840, 7, 7
    key = jax.random.PRNGKey(0)
    kx, kg, kb = jax.random.split(key, 3)

    x = jax.random.normal(kx, (N, C, H, W), dtype=jnp.float32)
    # Deterministic affine params (non-trivial so the affine path is exercised).
    gamma = 1.0 + 0.1 * jax.random.normal(kg, (C,), dtype=jnp.float32)
    beta = 0.1 * jax.random.normal(kb, (C,), dtype=jnp.float32)

    out = batchnorm2d_train(x, gamma, beta, eps=1e-3)
    out = jax.block_until_ready(out)

    ref = batchnorm2d_ref(x, gamma, beta, eps=1e-3)
    assert out.shape == (N, C, H, W)
    assert jnp.max(jnp.abs(out - ref)) < 1e-4, "mismatch vs reference"

    print("KERNEL_OK")
</pallas_src>

<mosaic_0001>
module attributes {stable_mosaic.version = 11 : i64} {
  func.func @_bn_kernel(%arg0: i32, %arg1: memref<49x1920xf32, #tpu.memory_space<vmem>>, %arg2: memref<2x1920xf32, #tpu.memory_space<vmem>>, %arg3: memref<49x1920xf32, #tpu.memory_space<vmem>>) attributes {dimension_semantics = [#tpu.dimension_semantics<parallel>], iteration_bounds = array<i64: 2>, scalar_prefetch = 0 : i64, scratch_operands = 0 : i64, tpu.core_type = #tpu.core_type<tc>, window_params = [{transform_indices = @transform_0, window_bounds = array<i64: 49, 1920>}, {transform_indices = @transform_1, window_bounds = array<i64: 2, 1920>}, {transform_indices = @transform_2, window_bounds = array<i64: 49, 1920>}]} {
    %c0 = arith.constant 0 : index
    %c0_0 = arith.constant 0 : index
    %0 = vector.load %arg1[%c0, %c0_0] : memref<49x1920xf32, #tpu.memory_space<vmem>>, vector<49x1920xf32>
    %cst = arith.constant dense<0.000000e+00> : vector<1920xf32>
    %1 = vector.multi_reduction <add>, %0, %cst [0] : vector<49x1920xf32> to vector<1920xf32>
    %2 = vector.shape_cast %1 : vector<1920xf32> to vector<1x1920xf32>
    %cst_1 = arith.constant 0.0204081628 : f32
    %3 = vector.broadcast %cst_1 : f32 to vector<1x1920xf32>
    %4 = arith.mulf %2, %3 : vector<1x1920xf32>
    %5 = vector.broadcast %4 : vector<1x1920xf32> to vector<49x1920xf32>
    %6 = arith.subf %0, %5 : vector<49x1920xf32>
    %7 = arith.mulf %6, %6 : vector<49x1920xf32>
    %cst_2 = arith.constant dense<0.000000e+00> : vector<1920xf32>
    %8 = vector.multi_reduction <add>, %7, %cst_2 [0] : vector<49x1920xf32> to vector<1920xf32>
    %9 = vector.shape_cast %8 : vector<1920xf32> to vector<1x1920xf32>
    %cst_3 = arith.constant 0.0204081628 : f32
    %10 = vector.broadcast %cst_3 : f32 to vector<1x1920xf32>
    %11 = arith.mulf %9, %10 : vector<1x1920xf32>
    %cst_4 = arith.constant 1.000000e-03 : f32
    %12 = vector.broadcast %cst_4 : f32 to vector<1x1920xf32>
    %13 = arith.addf %11, %12 : vector<1x1920xf32>
    %14 = math.rsqrt %13 : vector<1x1920xf32>
    %c0_5 = arith.constant 0 : index
    %c0_6 = arith.constant 0 : index
    %15 = vector.load %arg2[%c0_5, %c0_6] : memref<2x1920xf32, #tpu.memory_space<vmem>>, vector<1x1920xf32>
    %c1 = arith.constant 1 : index
    %c0_7 = arith.constant 0 : index
    %16 = vector.load %arg2[%c1, %c0_7] : memref<2x1920xf32, #tpu.memory_space<vmem>>, vector<1x1920xf32>
    %17 = arith.mulf %14, %15 : vector<1x1920xf32>
    %18 = vector.broadcast %17 : vector<1x1920xf32> to vector<49x1920xf32>
    %19 = arith.mulf %6, %18 : vector<49x1920xf32>
    %20 = vector.broadcast %16 : vector<1x1920xf32> to vector<49x1920xf32>
    %21 = arith.addf %19, %20 : vector<49x1920xf32>
    %c0_8 = arith.constant 0 : index
    %c0_9 = arith.constant 0 : index
    %22 = vector.load %arg3[%c0_8, %c0_9] : memref<49x1920xf32, #tpu.memory_space<vmem>>, vector<49x1920xf32>
    tpu.vector_store %arg3[%c0_8, %c0_9], %21 {strides = array<i32>} : memref<49x1920xf32, #tpu.memory_space<vmem>>, vector<49x1920xf32>,
    return
  }
  func.func @transform_0(%arg0: i32) -> (i32, i32) {
    %c0_i32 = arith.constant 0 : i32
    %c0_i32_0 = arith.constant 0 : i32
    return %c0_i32, %arg0 : i32, i32
  }
  func.func @transform_1(%arg0: i32) -> (i32, i32) {
    %c0_i32 = arith.constant 0 : i32
    %c0_i32_0 = arith.constant 0 : i32
    return %c0_i32, %arg0 : i32, i32
  }
  func.func @transform_2(%arg0: i32) -> (i32, i32) {
    %c0_i32 = arith.constant 0 : i32
    %c0_i32_0 = arith.constant 0 : i32
    return %c0_i32, %arg0 : i32, i32
  }
}

</mosaic_0001>

<llo_original>
// kernel: tpu_custom_call.1
$region0: #{tpu_custom_call.1}
  #allocation0 [shape = 'u32[]', space=smem, size = 0x4, offset = 0x4, fixed_abs, tag = 'smem constant byte address 0x4 - core index']
  #allocation1 [shape = 'u32[144,128]{1,0:T(1,128)}', space=vmem, size = 0x12000, scoped, tag = 'internal scratch']
  %s0 = inlined_call_operand.hbm [shape: f32[49,3840], index: 0, kind: input, shape index: {}]
  %s1 = inlined_call_operand.hbm [shape: f32[2,3840], index: 1, kind: input, shape index: {}]
  %s2 = inlined_call_operand.hbm [shape: f32[49,3840], index: 2, kind: output, shape index: {}]
  %s3 = sld [smem:[#allocation0]]
  $region49: #{tpu_custom_call.1} parent=0
    _
  %s5 = ssub.s32 1, %s3
  %s6 = scalar_select 0, %s5, %s3
  $region1: #{tpu_custom_call.1} parent=0
    #allocation2 [shape = 'u8[860160]{0}', space=vmem, size = 0xd2000, scoped, tag = 'input window, operand 0']
    #allocation3 [shape = 's32[2]{0}', space=sflag, size = 0x8, scoped, tag = 'scoped memory for tpu_custom_call.1']
    #allocation4 [shape = 's32[2]{0}', space=sflag, size = 0x8, scoped, tag = 'scoped memory for tpu_custom_call.1']
    #allocation5 [shape = 'u8[30720]{0}', space=vmem, size = 0x7800, scoped, tag = 'input window, operand 1']
    #allocation6 [shape = 's32[2]{0}', space=sflag, size = 0x8, scoped, tag = 'scoped memory for tpu_custom_call.1']
    #allocation7 [shape = 'u8[860160]{0}', space=vmem, size = 0xd2000, scoped, tag = 'output window, operand 0']
    %7 = vsyncpa [#allocation3], 0
    %s8 = scalar_lea.sflag [#allocation3], 1
    %9 = vsyncpa %s8, 0
    %10 = vsyncpa [#allocation6], 0
    %s11 = scalar_lea.sflag [#allocation6], 1
    %12 = vsyncpa %s11, 0
    %13 = vsyncpa [#allocation4], 0
    %s14 = scalar_lea.sflag [#allocation4], 1
    %15 = vsyncpa %s14, 0
    loop: start=0, step=1, limit=4
    $region2: #{tpu_custom_call.1} parent=1 // loop_pre_header
      _
    $region3: #{tpu_custom_call.1} parent=1 // loop_header
      %s17 = sphi 0, %s21
      %p18 = scmp.ge.s32.totalorder %s17, 4
      %s27 = sphi 0, %s29
      %s30 = sphi 0, %s27
      %s31 = sphi 0, %s30
      %s47 = sphi 0, %s31
      %s53 = sphi 0, %s55
      %s56 = sphi 0, %s53
      %s57 = sphi 0, %s56
      %s73 = sphi 0, %s57
      %s79 = sphi 0, %s81
      %s82 = sphi 0, %s79
      %s83 = sphi 0, %s82
      %s99 = sphi 0, %s83
    $region4: #{tpu_custom_call.1} parent=1 // loop_header_branch
      %20 = sbr.rel (%p18) target = $region8
    $region5: #{tpu_custom_call.1} parent=1 // loop_body
      %s22 = ssub.s32 %s17, 1
      %s23 = ssub.s32 %s17, 2
      %s24 = sadd.s32 %s17, 1
      %s25 = ssub.s32 %s17, %s24
      %p26 = scmp.eq.s32.totalorder %s25, 0
      %s28 = sadd.s32 %s27, 1
      %s29 = scalar_select %p26, %s27, %s28
      %p32 = pneg %p26
      %p33 = scmp.eq.s32.totalorder %s17, 1
      %p34 = por %p32, %p33
      %p35 = scmp.ne.s32.totalorder %s27, %s30
      %p36 = scmp.eq.s32.totalorder %s17, 0
      %p37 = por %p35, %p36
      %p38 = scmp.ne.s32.totalorder %s27, %s30
      %p39 = scmp.eq.s32.totalorder %s22, 1
      %p40 = por %p38, %p39
      %p41 = scmp.ne.s32.totalorder %s30, %s31
      %p42 = scmp.eq.s32.totalorder %s22, 0
      %p43 = por %p41, %p42
      %p44 = scmp.ne.s32.totalorder %s30, %s31
      %p45 = scmp.eq.s32.totalorder %s23, 1
      %p46 = por %p44, %p45
      %p48 = scmp.ne.s32.totalorder %s31, %s47
      %p49 = scmp.eq.s32.totalorder %s23, 0
      %p50 = por %p48, %p49
      %s51 = ssub.s32 %s17, %s24
      %p52 = scmp.eq.s32.totalorder %s51, 0
      %s54 = sadd.s32 %s53, 1
      %s55 = scalar_select %p52, %s53, %s54
      %p58 = pneg %p52
      %p59 = scmp.eq.s32.totalorder %s17, 1
      %p60 = por %p58, %p59
      %p61 = scmp.ne.s32.totalorder %s53, %s56
      %p62 = scmp.eq.s32.totalorder %s17, 0
      %p63 = por %p61, %p62
      %p64 = scmp.ne.s32.totalorder %s53, %s56
      %p65 = scmp.eq.s32.totalorder %s22, 1
      %p66 = por %p64, %p65
      %p67 = scmp.ne.s32.totalorder %s56, %s57
      %p68 = scmp.eq.s32.totalorder %s22, 0
      %p69 = por %p67, %p68
      %p70 = scmp.ne.s32.totalorder %s56, %s57
      %p71 = scmp.eq.s32.totalorder %s23, 1
      %p72 = por %p70, %p71
      %p74 = scmp.ne.s32.totalorder %s57, %s73
      %p75 = scmp.eq.s32.totalorder %s23, 0
      %p76 = por %p74, %p75
      %s77 = ssub.s32 %s17, %s24
      %p78 = scmp.eq.s32.totalorder %s77, 0
      %s80 = sadd.s32 %s79, 1
      %s81 = scalar_select %p78, %s79, %s80
      %p84 = pneg %p78
      %p85 = scmp.eq.s32.totalorder %s17, 1
      %p86 = por %p84, %p85
      %p87 = scmp.ne.s32.totalorder %s79, %s82
      %p88 = scmp.eq.s32.totalorder %s17, 0
      %p89 = por %p87, %p88
      %p90 = scmp.ne.s32.totalorder %s79, %s82
      %p91 = scmp.eq.s32.totalorder %s22, 1
      %p92 = por %p90, %p91
      %p93 = scmp.ne.s32.totalorder %s82, %s83
      %p94 = scmp.eq.s32.totalorder %s22, 0
      %p95 = por %p93, %p94
      %p96 = scmp.ne.s32.totalorder %s82, %s83
      %p97 = scmp.eq.s32.totalorder %s23, 1
      %p98 = por %p96, %p97
      %p100 = scmp.ne.s32.totalorder %s83, %s99
      %p101 = scmp.eq.s32.totalorder %s23, 0
      %p102 = por %p100, %p101
      %p103 = scmp.le.s32.totalorder 1, %s17
      %p104 = scmp.lt.s32.totalorder %s17, 3
      %p105 = pnand %p103, %p104
      %p106 = pneg %p105
      // Predicated region
      $region9: #{tpu_custom_call.1} parent=5 // pred_check
        _
      $region10: #{tpu_custom_call.1} parent=5 // pred_check_branch
        %108 = sbr.rel (%p105) target = $region12
      $region11: #{tpu_custom_call.1} parent=5 // pred_region
        %s109 = ssub.s32 %s17, 1
      $region12: #{tpu_custom_call.1} parent=5 // pred_fallthru
        _
      %p110 = scmp.lt.s32.totalorder %s17, 2
      // Predicated region
      $region13: #{tpu_custom_call.1} parent=5 // pred_check
        %p111 = pneg %p110
      $region14: #{tpu_custom_call.1} parent=5 // pred_check_branch
        %113 = sbr.rel (%p111) target = $region16
      $region15: #{tpu_custom_call.1} parent=5 // pred_region
        // Predicated region
        $region17: #{tpu_custom_call.1} parent=15 // pred_check
          %p114 = pneg %p37
        $region18: #{tpu_custom_call.1} parent=15 // pred_check_branch
          %116 = sbr.rel (%p114) target = $region20
        $region19: #{tpu_custom_call.1} parent=15 // pred_region
          %s117 = sand.u32 %s27, 1
          %s118 = scalar_lea.sflag [#allocation3], %s117
          %s119 = sand.u32 %s27, 1
          %s120 = smul.addr %s119, 840
          %s121 = scalar_lea.vmem [#allocation2], %s120
          %s122 = smul.u32 15, %s17
          %s124 = ssub.s32 13440, 13440
          %125 = vsyncadd %s118, %s124
          %s126 = smul.addr %s122, 128
          %s127 = scalar_lea.hbm %s0, %s126
          %s128 = sshll.u32 %s121, 4
          %s129 = int_to_ptr.vmem [resolvable:$true] %s128
          %134 = dma.hbm_to_vmem [thread:$0]  %s127, 13440, %s129, %s118, 3840, 1920, 120
        $region20: #{tpu_custom_call.1} parent=15 // pred_fallthru
          _
        // Predicated region
        $region21: #{tpu_custom_call.1} parent=15 // pred_check
          %p135 = pneg %p63
        $region22: #{tpu_custom_call.1} parent=15 // pred_check_branch
          %137 = sbr.rel (%p135) target = $region24
        $region23: #{tpu_custom_call.1} parent=15 // pred_region
          %s138 = sand.u32 %s53, 1
          %s139 = scalar_lea.sflag [#allocation6], %s138
          %s140 = sand.u32 %s53, 1
          %s141 = smul.addr %s140, 30
          %s142 = scalar_lea.vmem [#allocation5], %s141
          %s143 = smul.u32 15, %s17
          %s145 = ssub.s32 480, 480
          %146 = vsyncadd %s139, %s145
          %s147 = smul.addr %s143, 32
          %s148 = scalar_lea.hbm %s1, %s147
          %s150 = sshll.u32 %s142, 4
          %s151 = int_to_ptr.vmem [resolvable:$true] %s150
          %153 = dma.hbm_to_vmem [thread:$0]  %s148, 480, %s151, %s139
        $region24: #{tpu_custom_call.1} parent=15 // pred_fallthru
          _
      $region16: #{tpu_custom_call.1} parent=5 // pred_fallthru
        _
      %p154 = scmp.le.s32.totalorder 1, %s17
      %p155 = scmp.lt.s32.totalorder %s17, 3
      %p156 = pnand %p154, %p155
      %p157 = pneg %p156
      // Predicated region
      $region25: #{tpu_custom_call.1} parent=5 // pred_check
        _
      $region26: #{tpu_custom_call.1} parent=5 // pred_check_branch
        %159 = sbr.rel (%p156) target = $region28
      $region27: #{tpu_custom_call.1} parent=5 // pred_region
        %s160 = ssub.s32 %s17, 1
        %s161 = sand.u32 %s30, 1
        %s162 = scalar_lea.sflag [#allocation3], %s161
        %s163 = sand.u32 %s30, 1
        %s164 = smul.addr %s163, 840
        %s165 = scalar_lea.vmem [#allocation2], %s164
        // Predicated region
        $region29: #{tpu_custom_call.1} parent=27 // pred_check
          %p166 = pneg %p43
        $region30: #{tpu_custom_call.1} parent=27 // pred_check_branch
          %168 = sbr.rel (%p166) target = $region32
        $region31: #{tpu_custom_call.1} parent=27 // pred_region
          %169 = dma.done %s162, 13440
        $region32: #{tpu_custom_call.1} parent=27 // pred_fallthru
          _
        %s170 = sand.u32 %s56, 1
        %s171 = scalar_lea.sflag [#allocation6], %s170
        %s172 = sand.u32 %s56, 1
        %s173 = smul.addr %s172, 30
        %s174 = scalar_lea.vmem [#allocation5], %s173
        // Predicated region
        $region33: #{tpu_custom_call.1} parent=27 // pred_check
          %p175 = pneg %p69
        $region34: #{tpu_custom_call.1} parent=27 // pred_check_branch
          %177 = sbr.rel (%p175) target = $region36
        $region35: #{tpu_custom_call.1} parent=27 // pred_region
          %178 = dma.done %s171, 480
        $region36: #{tpu_custom_call.1} parent=27 // pred_fallthru
          _
        %s179 = sand.u32 %s30, 1
        %s180 = scalar_lea.sflag [#allocation3], %s179
        %s181 = sand.u32 %s30, 1
        %s182 = smul.addr %s181, 840
        %s183 = scalar_lea.vmem [#allocation2], %s182
        %p184 = pneg %p43
        %p185 = pneg %p40
        %s186 = sand.u32 %s56, 1
        %s187 = scalar_lea.sflag [#allocation6], %s186
        %s188 = sand.u32 %s56, 1
        %s189 = smul.addr %s188, 30
        %s190 = scalar_lea.vmem [#allocation5], %s189
        %p191 = pneg %p69
        %p192 = pneg %p66
        %p193 = pneg %p95
        %p194 = pneg %p92
        %s195 = sand.u32 %s82, 1
        %s196 = scalar_lea.sflag [#allocation4], %s195
        %s197 = sand.u32 %s82, 1
        %s198 = smul.addr %s197, 840
        %s199 = scalar_lea.vmem [#allocation7], %s198
        %s200 = smul.u32 15, %s22
        %s201 = smul.u32 15, %s22
        %s202 = smul.u32 15, %s22
        %v203 = vld [vmem:[%s165] sm:$0xff]
        %v204 = vld [vmem:[%s165 + $0x8] sm:$0xff]
        %v205 = vld [vmem:[%s165 + $0x10] sm:$0xff]
        %v206 = vld [vmem:[%s165 + $0x18] sm:$0xff]
        %v207 = vld [vmem:[%s165 + $0x20] sm:$0xff]
        %v208 = vld [vmem:[%s165 + $0x28] sm:$0xff]
        %v209 = vld [vmem:[%s165 + $0x30] sm:$0xff]
        %v210 = vld [vmem:[%s165 + $0x38] sm:$0xff]
        %v211 = vld [vmem:[%s165 + $0x40] sm:$0xff]
        %v212 = vld [vmem:[%s165 + $0x48] sm:$0xff]
        %v213 = vld [vmem:[%s165 + $0x50] sm:$0xff]
        %v214 = vld [vmem:[%s165 + $0x58] sm:$0xff]
        %v215 = vld [vmem:[%s165 + $0x60] sm:$0xff]
        %v216 = vld [vmem:[%s165 + $0x68] sm:$0xff]
        %v217 = vld [vmem:[%s165 + $0x70] sm:$0xff]
        %v218 = vld [vmem:[%s165 + $0x78] sm:$0xff]
        %v219 = vld [vmem:[%s165 + $0x80] sm:$0xff]
        %v220 = vld [vmem:[%s165 + $0x88] sm:$0xff]
        %v221 = vld [vmem:[%s165 + $0x90] sm:$0xff]
        %v222 = vld [vmem:[%s165 + $0x98] sm:$0xff]
        %v223 = vld [vmem:[%s165 + $0xa0] sm:$0xff]
        %v224 = vld [vmem:[%s165 + $0xa8] sm:$0xff]
        %v225 = vld [vmem:[%s165 + $0xb0] sm:$0xff]
        %v226 = vld [vmem:[%s165 + $0xb8] sm:$0xff]
        %v227 = vld [vmem:[%s165 + $0xc0] sm:$0xff]
        %v228 = vld [vmem:[%s165 + $0xc8] sm:$0xff]
        %v229 = vld [vmem:[%s165 + $0xd0] sm:$0xff]
        %v230 = vld [vmem:[%s165 + $0xd8] sm:$0xff]
        %v231 = vld [vmem:[%s165 + $0xe0] sm:$0xff]
        %v232 = vld [vmem:[%s165 + $0xe8] sm:$0xff]
        %v233 = vld [vmem:[%s165 + $0xf0] sm:$0xff]
        %v234 = vld [vmem:[%s165 + $0xf8] sm:$0xff]
        %v235 = vld [vmem:[%s165 + $0x100] sm:$0xff]
        %v236 = vld [vmem:[%s165 + $0x108] sm:$0xff]
        %v237 = vld [vmem:[%s165 + $0x110] sm:$0xff]
        %v238 = vld [vmem:[%s165 + $0x118] sm:$0xff]
        %v239 = vld [vmem:[%s165 + $0x120] sm:$0xff]
        %v240 = vld [vmem:[%s165 + $0x128] sm:$0xff]
        %v241 = vld [vmem:[%s165 + $0x130] sm:$0xff]
        %v242 = vld [vmem:[%s165 + $0x138] sm:$0xff]
        %v243 = vld [vmem:[%s165 + $0x140] sm:$0xff]
        %v244 = vld [vmem:[%s165 + $0x148] sm:$0xff]
        %v245 = vld [vmem:[%s165 + $0x150] sm:$0xff]
        %v246 = vld [vmem:[%s165 + $0x158] sm:$0xff]
        %v247 = vld [vmem:[%s165 + $0x160] sm:$0xff]
        %v248 = vld [vmem:[%s165 + $0x168] sm:$0xff]
        %v249 = vld [vmem:[%s165 + $0x170] sm:$0xff]
        %v250 = vld [vmem:[%s165 + $0x178] sm:$0xff]
        %v251 = vld [vmem:[%s165 + $0x180] sm:$0xff]
        %v252 = vld [vmem:[%s165 + $0x188] sm:$0xff]
        %v253 = vld [vmem:[%s165 + $0x190] sm:$0xff]
        %v254 = vld [vmem:[%s165 + $0x198] sm:$0xff]
        %v255 = vld [vmem:[%s165 + $0x1a0] sm:$0xff]
        %v256 = vld [vmem:[%s165 + $0x1a8] sm:$0xff]
        %v257 = vld [vmem:[%s165 + $0x1b0] sm:$0xff]
        %v258 = vld [vmem:[%s165 + $0x1b8] sm:$0xff]
        %v259 = vld [vmem:[%s165 + $0x1c0] sm:$0xff]
        %v260 = vld [vmem:[%s165 + $0x1c8] sm:$0xff]
        %v261 = vld [vmem:[%s165 + $0x1d0] sm:$0xff]
        %v262 = vld [vmem:[%s165 + $0x1d8] sm:$0xff]
        %v263 = vld [vmem:[%s165 + $0x1e0] sm:$0xff]
        %v264 = vld [vmem:[%s165 + $0x1e8] sm:$0xff]
        %v265 = vld [vmem:[%s165 + $0x1f0] sm:$0xff]
        %v266 = vld [vmem:[%s165 + $0x1f8] sm:$0xff]
        %v267 = vld [vmem:[%s165 + $0x200] sm:$0xff]
        %v268 = vld [vmem:[%s165 + $0x208] sm:$0xff]
        %v269 = vld [vmem:[%s165 + $0x210] sm:$0xff]
        %v270 = vld [vmem:[%s165 + $0x218] sm:$0xff]
        %v271 = vld [vmem:[%s165 + $0x220] sm:$0xff]
        %v272 = vld [vmem:[%s165 + $0x228] sm:$0xff]
        %v273 = vld [vmem:[%s165 + $0x230] sm:$0xff]
        %v274 = vld [vmem:[%s165 + $0x238] sm:$0xff]
        %v275 = vld [vmem:[%s165 + $0x240] sm:$0xff]
        %v276 = vld [vmem:[%s165 + $0x248] sm:$0xff]
        %v277 = vld [vmem:[%s165 + $0x250] sm:$0xff]
        %v278 = vld [vmem:[%s165 + $0x258] sm:$0xff]
        %v279 = vld [vmem:[%s165 + $0x260] sm:$0xff]
        %v280 = vld [vmem:[%s165 + $0x268] sm:$0xff]
        %v281 = vld [vmem:[%s165 + $0x270] sm:$0xff]
        %v282 = vld [vmem:[%s165 + $0x278] sm:$0xff]
        %v283 = vld [vmem:[%s165 + $0x280] sm:$0xff]
        %v284 = vld [vmem:[%s165 + $0x288] sm:$0xff]
        %v285 = vld [vmem:[%s165 + $0x290] sm:$0xff]
        %v286 = vld [vmem:[%s165 + $0x298] sm:$0xff]
        %v287 = vld [vmem:[%s165 + $0x2a0] sm:$0xff]
        %v288 = vld [vmem:[%s165 + $0x2a8] sm:$0xff]
        %v289 = vld [vmem:[%s165 + $0x2b0] sm:$0xff]
        %v290 = vld [vmem:[%s165 + $0x2b8] sm:$0xff]
        %v291 = vld [vmem:[%s165 + $0x2c0] sm:$0xff]
        %v292 = vld [vmem:[%s165 + $0x2c8] sm:$0xff]
        %v293 = vld [vmem:[%s165 + $0x2d0] sm:$0x1]
        %v294 = vld [vmem:[%s165 + $0x2d8] sm:$0x1]
        %v295 = vld [vmem:[%s165 + $0x2e0] sm:$0x1]
        %v296 = vld [vmem:[%s165 + $0x2e8] sm:$0x1]
        %v297 = vld [vmem:[%s165 + $0x2f0] sm:$0x1]
        %v298 = vld [vmem:[%s165 + $0x2f8] sm:$0x1]
        %v299 = vld [vmem:[%s165 + $0x300] sm:$0x1]
        %v300 = vld [vmem:[%s165 + $0x308] sm:$0x1]
        %v301 = vld [vmem:[%s165 + $0x310] sm:$0x1]
        %v302 = vld [vmem:[%s165 + $0x318] sm:$0x1]
        %v303 = vld [vmem:[%s165 + $0x320] sm:$0x1]
        %v304 = vld [vmem:[%s165 + $0x328] sm:$0x1]
        %v305 = vld [vmem:[%s165 + $0x330] sm:$0x1]
        %v306 = vld [vmem:[%s165 + $0x338] sm:$0x1]
        %v307 = vld [vmem:[%s165 + $0x340] sm:$0x1]
        %v308 = vadd.f32 %v203, %v218
        %v309 = vadd.f32 %v308, %v233
        %v310 = vadd.f32 %v309, %v248
        %v311 = vadd.f32 %v310, %v263
        %v312 = vadd.f32 %v311, %v278
        %vm313 = vcmask 1040384
        %v314 = vsel %vm313, %v293, 0.0
        %v315 = vadd.f32 %v312, %v314
        %v316 = vrot.slane %v315, 4
        %v317 = vadd.f32 %v315, %v316
        %v318 = vrot.slane %v317, 2
        %v319 = vadd.f32 %v317, %v318
        %v320 = vrot.slane %v319, 1
        %v321 = vadd.f32 %v319, %v320
        %v322 = vadd.f32 %v204, %v219
        %v323 = vadd.f32 %v322, %v234
        %v324 = vadd.f32 %v323, %v249
        %v325 = vadd.f32 %v324, %v264
        %v326 = vadd.f32 %v325, %v279
        %v327 = vsel %vm313, %v294, 0.0
        %v328 = vadd.f32 %v326, %v327
        %v329 = vrot.slane %v328, 4
        %v330 = vadd.f32 %v328, %v329
        %v331 = vrot.slane %v330, 2
        %v332 = vadd.f32 %v330, %v331
        %v333 = vrot.slane %v332, 1
        %v334 = vadd.f32 %v332, %v333
        %v335 = vadd.f32 %v205, %v220
        %v336 = vadd.f32 %v335, %v235
        %v337 = vadd.f32 %v336, %v250
        %v338 = vadd.f32 %v337, %v265
        %v339 = vadd.f32 %v338, %v280
        %v340 = vsel %vm313, %v295, 0.0
        %v341 = vadd.f32 %v339, %v340
        %v342 = vrot.slane %v341, 4
        %v343 = vadd.f32 %v341, %v342
        %v344 = vrot.slane %v343, 2
        %v345 = vadd.f32 %v343, %v344
        %v346 = vrot.slane %v345, 1
        %v347 = vadd.f32 %v345, %v346
        %v348 = vadd.f32 %v206, %v221
        %v349 = vadd.f32 %v348, %v236
        %v350 = vadd.f32 %v349, %v251
        %v351 = vadd.f32 %v350, %v266
        %v352 = vadd.f32 %v351, %v281
        %v353 = vsel %vm313, %v296, 0.0
        %v354 = vadd.f32 %v352, %v353
        %v355 = vrot.slane %v354, 4
        %v356 = vadd.f32 %v354, %v355
        %v357 = vrot.slane %v356, 2
        %v358 = vadd.f32 %v356, %v357
        %v359 = vrot.slane %v358, 1
        %v360 = vadd.f32 %v358, %v359
        %v361 = vadd.f32 %v207, %v222
        %v362 = vadd.f32 %v361, %v237
        %v363 = vadd.f32 %v362, %v252
        %v364 = vadd.f32 %v363, %v267
        %v365 = vadd.f32 %v364, %v282
        %v366 = vsel %vm313, %v297, 0.0
        %v367 = vadd.f32 %v365, %v366
        %v368 = vrot.slane %v367, 4
        %v369 = vadd.f32 %v367, %v368
        %v370 = vrot.slane %v369, 2
        %v371 = vadd.f32 %v369, %v370
        %v372 = vrot.slane %v371, 1
        %v373 = vadd.f32 %v371, %v372
        %v374 = vadd.f32 %v208, %v223
        %v375 = vadd.f32 %v374, %v238
        %v376 = vadd.f32 %v375, %v253
        %v377 = vadd.f32 %v376, %v268
        %v378 = vadd.f32 %v377, %v283
        %v379 = vsel %vm313, %v298, 0.0
        %v380 = vadd.f32 %v378, %v379
        %v381 = vrot.slane %v380, 4
        %v382 = vadd.f32 %v380, %v381
        %v383 = vrot.slane %v382, 2
        %v384 = vadd.f32 %v382, %v383
        %v385 = vrot.slane %v384, 1
        %v386 = vadd.f32 %v384, %v385
        %v387 = vadd.f32 %v209, %v224
        %v388 = vadd.f32 %v387, %v239
        %v389 = vadd.f32 %v388, %v254
        %v390 = vadd.f32 %v389, %v269
        %v391 = vadd.f32 %v390, %v284
        %v392 = vsel %vm313, %v299, 0.0
        %v393 = vadd.f32 %v391, %v392
        %v394 = vrot.slane %v393, 4
        %v395 = vadd.f32 %v393, %v394
        %v396 = vrot.slane %v395, 2
        %v397 = vadd.f32 %v395, %v396
        %v398 = vrot.slane %v397, 1
        %v399 = vadd.f32 %v397, %v398
        %v400 = vadd.f32 %v210, %v225
        %v401 = vadd.f32 %v400, %v240
        %v402 = vadd.f32 %v401, %v255
        %v403 = vadd.f32 %v402, %v270
        %v404 = vadd.f32 %v403, %v285
        %v405 = vsel %vm313, %v300, 0.0
        %v406 = vadd.f32 %v404, %v405
        %v407 = vrot.slane %v406, 4
        %v408 = vadd.f32 %v406, %v407
        %v409 = vrot.slane %v408, 2
        %v410 = vadd.f32 %v408, %v409
        %v411 = vrot.slane %v410, 1
        %v412 = vadd.f32 %v410, %v411
        %v413 = vadd.f32 %v211, %v226
        %v414 = vadd.f32 %v413, %v241
        %v415 = vadd.f32 %v414, %v256
        %v416 = vadd.f32 %v415, %v271
        %v417 = vadd.f32 %v416, %v286
        %v418 = vsel %vm313, %v301, 0.0
        %v419 = vadd.f32 %v417, %v418
        %v420 = vrot.slane %v419, 4
        %v421 = vadd.f32 %v419, %v420
        %v422 = vrot.slane %v421, 2
        %v423 = vadd.f32 %v421, %v422
        %v424 = vrot.slane %v423, 1
        %v425 = vadd.f32 %v423, %v424
        %v426 = vadd.f32 %v212, %v227
        %v427 = vadd.f32 %v426, %v242
        %v428 = vadd.f32 %v427, %v257
        %v429 = vadd.f32 %v428, %v272
        %v430 = vadd.f32 %v429, %v287
        %v431 = vsel %vm313, %v302, 0.0
        %v432 = vadd.f32 %v430, %v431
        %v433 = vrot.slane %v432, 4
        %v434 = vadd.f32 %v432, %v433
        %v435 = vrot.slane %v434, 2
        %v436 = vadd.f32 %v434, %v435
        %v437 = vrot.slane %v436, 1
        %v438 = vadd.f32 %v436, %v437
        %v439 = vadd.f32 %v213, %v228
        %v440 = vadd.f32 %v439, %v243
        %v441 = vadd.f32 %v440, %v258
        %v442 = vadd.f32 %v441, %v273
        %v443 = vadd.f32 %v442, %v288
        %v444 = vsel %vm313, %v303, 0.0
        %v445 = vadd.f32 %v443, %v444
        %v446 = vrot.slane %v445, 4
        %v447 = vadd.f32 %v445, %v446
        %v448 = vrot.slane %v447, 2
        %v449 = vadd.f32 %v447, %v448
        %v450 = vrot.slane %v449, 1
        %v451 = vadd.f32 %v449, %v450
        %v452 = vadd.f32 %v214, %v229
        %v453 = vadd.f32 %v452, %v244
        %v454 = vadd.f32 %v453, %v259
        %v455 = vadd.f32 %v454, %v274
        %v456 = vadd.f32 %v455, %v289
        %v457 = vsel %vm313, %v304, 0.0
        %v458 = vadd.f32 %v456, %v457
        %v459 = vrot.slane %v458, 4
        %v460 = vadd.f32 %v458, %v459
        %v461 = vrot.slane %v460, 2
        %v462 = vadd.f32 %v460, %v461
        %v463 = vrot.slane %v462, 1
        %v464 = vadd.f32 %v462, %v463
        %v465 = vadd.f32 %v215, %v230
        %v466 = vadd.f32 %v465, %v245
        %v467 = vadd.f32 %v466, %v260
        %v468 = vadd.f32 %v467, %v275
        %v469 = vadd.f32 %v468, %v290
        %v470 = vsel %vm313, %v305, 0.0
        %v471 = vadd.f32 %v469, %v470
        %v472 = vrot.slane %v471, 4
        %v473 = vadd.f32 %v471, %v472
        %v474 = vrot.slane %v473, 2
        %v475 = vadd.f32 %v473, %v474
        %v476 = vrot.slane %v475, 1
        %v477 = vadd.f32 %v475, %v476
        %v478 = vadd.f32 %v216, %v231
        %v479 = vadd.f32 %v478, %v246
        %v480 = vadd.f32 %v479, %v261
        %v481 = vadd.f32 %v480, %v276
        %v482 = vadd.f32 %v481, %v291
        %v483 = vsel %vm313, %v306, 0.0
        %v484 = vadd.f32 %v482, %v483
        %v485 = vrot.slane %v484, 4
        %v486 = vadd.f32 %v484, %v485
        %v487 = vrot.slane %v486, 2
        %v488 = vadd.f32 %v486, %v487
        %v489 = vrot.slane %v488, 1
        %v490 = vadd.f32 %v488, %v489
        %v491 = vadd.f32 %v217, %v232
        %v492 = vadd.f32 %v491, %v247
        %v493 = vadd.f32 %v492, %v262
        %v494 = vadd.f32 %v493, %v277
        %v495 = vadd.f32 %v494, %v292
        %v496 = vsel %vm313, %v307, 0.0
        %v497 = vadd.f32 %v495, %v496
        %v498 = vrot.slane %v497, 4
        %v499 = vadd.f32 %v497, %v498
        %v500 = vrot.slane %v499, 2
        %v501 = vadd.f32 %v499, %v500
        %v502 = vrot.slane %v501, 1
        %v503 = vadd.f32 %v501, %v502
        %v504 = vmul.f32 %v321, 0.020408163
        %v505 = vmul.f32 %v334, 0.020408163
        %v506 = vmul.f32 %v347, 0.020408163
        %v507 = vmul.f32 %v360, 0.020408163
        %v508 = vmul.f32 %v373, 0.020408163
        %v509 = vmul.f32 %v386, 0.020408163
        %v510 = vmul.f32 %v399, 0.020408163
        %v511 = vmul.f32 %v412, 0.020408163
        %v512 = vmul.f32 %v425, 0.020408163
        %v513 = vmul.f32 %v438, 0.020408163
        %v514 = vmul.f32 %v451, 0.020408163
        %v515 = vmul.f32 %v464, 0.020408163
        %v516 = vmul.f32 %v477, 0.020408163
        %v517 = vmul.f32 %v490, 0.020408163
        %v518 = vmul.f32 %v503, 0.020408163
        %v519 = vsub.f32 %v203, %v504
        %v520 = vsub.f32 %v204, %v505
        %v521 = vsub.f32 %v205, %v506
        %v522 = vsub.f32 %v206, %v507
        %v523 = vsub.f32 %v207, %v508
        %v524 = vsub.f32 %v208, %v509
        %v525 = vsub.f32 %v209, %v510
        %v526 = vsub.f32 %v210, %v511
        %v527 = vsub.f32 %v211, %v512
        %v528 = vsub.f32 %v212, %v513
        %v529 = vsub.f32 %v213, %v514
        %v530 = vsub.f32 %v214, %v515
        %v531 = vsub.f32 %v215, %v516
        %v532 = vsub.f32 %v216, %v517
        %v533 = vsub.f32 %v217, %v518
        %v534 = vsub.f32 %v218, %v504
        %v535 = vsub.f32 %v219, %v505
        %v536 = vsub.f32 %v220, %v506
        %v537 = vsub.f32 %v221, %v507
        %v538 = vsub.f32 %v222, %v508
        %v539 = vsub.f32 %v223, %v509
        %v540 = vsub.f32 %v224, %v510
        %v541 = vsub.f32 %v225, %v511
        %v542 = vsub.f32 %v226, %v512
        %v543 = vsub.f32 %v227, %v513
        %v544 = vsub.f32 %v228, %v514
        %v545 = vsub.f32 %v229, %v515
        %v546 = vsub.f32 %v230, %v516
        %v547 = vsub.f32 %v231, %v517
        %v548 = vsub.f32 %v232, %v518
        %v549 = vsub.f32 %v233, %v504
        %v550 = vsub.f32 %v234, %v505
        %v551 = vsub.f32 %v235, %v506
        %v552 = vsub.f32 %v236, %v507
        %v553 = vsub.f32 %v237, %v508
        %v554 = vsub.f32 %v238, %v509
        %v555 = vsub.f32 %v239, %v510
        %v556 = vsub.f32 %v240, %v511
        %v557 = vsub.f32 %v241, %v512
        %v558 = vsub.f32 %v242, %v513
        %v559 = vsub.f32 %v243, %v514
        %v560 = vsub.f32 %v244, %v515
        %v561 = vsub.f32 %v245, %v516
        %v562 = vsub.f32 %v246, %v517
        %v563 = vsub.f32 %v247, %v518
        %v564 = vsub.f32 %v248, %v504
        %v565 = vsub.f32 %v249, %v505
        %v566 = vsub.f32 %v250, %v506
        %v567 = vsub.f32 %v251, %v507
        %v568 = vsub.f32 %v252, %v508
        %v569 = vsub.f32 %v253, %v509
        %v570 = vsub.f32 %v254, %v510
        %v571 = vsub.f32 %v255, %v511
        %v572 = vsub.f32 %v256, %v512
        %v573 = vsub.f32 %v257, %v513
        %v574 = vsub.f32 %v258, %v514
        %v575 = vsub.f32 %v259, %v515
        %v576 = vsub.f32 %v260, %v516
        %v577 = vsub.f32 %v261, %v517
        %v578 = vsub.f32 %v262, %v518
        %v579 = vsub.f32 %v263, %v504
        %v580 = vsub.f32 %v264, %v505
        %v581 = vsub.f32 %v265, %v506
        %v582 = vsub.f32 %v266, %v507
        %v583 = vsub.f32 %v267, %v508
        %v584 = vsub.f32 %v268, %v509
        %v585 = vsub.f32 %v269, %v510
        %v586 = vsub.f32 %v270, %v511
        %v587 = vsub.f32 %v271, %v512
        %v588 = vsub.f32 %v272, %v513
        %v589 = vsub.f32 %v273, %v514
        %v590 = vsub.f32 %v274, %v515
        %v591 = vsub.f32 %v275, %v516
        %v592 = vsub.f32 %v276, %v517
        %v593 = vsub.f32 %v277, %v518
        %v594 = vsub.f32 %v278, %v504
        %v595 = vsub.f32 %v279, %v505
        %v596 = vsub.f32 %v280, %v506
        %v597 = vsub.f32 %v281, %v507
        %v598 = vsub.f32 %v282, %v508
        %v599 = vsub.f32 %v283, %v509
        %v600 = vsub.f32 %v284, %v510
        %v601 = vsub.f32 %v285, %v511
        %v602 = vsub.f32 %v286, %v512
        %v603 = vsub.f32 %v287, %v513
        %v604 = vsub.f32 %v288, %v514
        %v605 = vsub.f32 %v289, %v515
        %v606 = vsub.f32 %v290, %v516
        %v607 = vsub.f32 %v291, %v517
        %v608 = vsub.f32 %v292, %v518
        %v609 = vsub.f32 %v293, %v504
        %v610 = vsub.f32 %v294, %v505
        %v611 = vsub.f32 %v295, %v506
        %v612 = vsub.f32 %v296, %v507
        %v613 = vsub.f32 %v297, %v508
        %v614 = vsub.f32 %v298, %v509
        %v615 = vsub.f32 %v299, %v510
        %v616 = vsub.f32 %v300, %v511
        %v617 = vsub.f32 %v301, %v512
        %v618 = vsub.f32 %v302, %v513
        %v619 = vsub.f32 %v303, %v514
        %v620 = vsub.f32 %v304, %v515
        %v621 = vsub.f32 %v305, %v516
        %v622 = vsub.f32 %v306, %v517
        %v623 = vsub.f32 %v307, %v518
        %v624 = vmul.f32 %v519, %v519
        %v625 = vmul.f32 %v520, %v520
        %v626 = vmul.f32 %v521, %v521
        %v627 = vmul.f32 %v522, %v522
        %v628 = vmul.f32 %v523, %v523
        %v629 = vmul.f32 %v524, %v524
        %v630 = vmul.f32 %v525, %v525
        %v631 = vmul.f32 %v526, %v526
        %v632 = vmul.f32 %v527, %v527
        %v633 = vmul.f32 %v528, %v528
        %v634 = vmul.f32 %v529, %v529
        %v635 = vmul.f32 %v530, %v530
        %v636 = vmul.f32 %v531, %v531
        %v637 = vmul.f32 %v532, %v532
        %v638 = vmul.f32 %v533, %v533
        %v639 = vmul.f32 %v534, %v534
        %v640 = vmul.f32 %v535, %v535
        %v641 = vmul.f32 %v536, %v536
        %v642 = vmul.f32 %v537, %v537
        %v643 = vmul.f32 %v538, %v538
        %v644 = vmul.f32 %v539, %v539
        %v645 = vmul.f32 %v540, %v540
        %v646 = vmul.f32 %v541, %v541
        %v647 = vmul.f32 %v542, %v542
        %v648 = vmul.f32 %v543, %v543
        %v649 = vmul.f32 %v544, %v544
        %v650 = vmul.f32 %v545, %v545
        %v651 = vmul.f32 %v546, %v546
        %v652 = vmul.f32 %v547, %v547
        %v653 = vmul.f32 %v548, %v548
        %v654 = vmul.f32 %v549, %v549
        %v655 = vmul.f32 %v550, %v550
        %v656 = vmul.f32 %v551, %v551
        %v657 = vmul.f32 %v552, %v552
        %v658 = vmul.f32 %v553, %v553
        %v659 = vmul.f32 %v554, %v554
        %v660 = vmul.f32 %v555, %v555
        %v661 = vmul.f32 %v556, %v556
        %v662 = vmul.f32 %v557, %v557
        %v663 = vmul.f32 %v558, %v558
        %v664 = vmul.f32 %v559, %v559
        %v665 = vmul.f32 %v560, %v560
        %v666 = vmul.f32 %v561, %v561
        %v667 = vmul.f32 %v562, %v562
        %v668 = vmul.f32 %v563, %v563
        %v669 = vmul.f32 %v564, %v564
        %v670 = vmul.f32 %v565, %v565
        %v671 = vmul.f32 %v566, %v566
        %v672 = vmul.f32 %v567, %v567
        %v673 = vmul.f32 %v568, %v568
        %v674 = vmul.f32 %v569, %v569
        %v675 = vmul.f32 %v570, %v570
        %v676 = vmul.f32 %v571, %v571
        %v677 = vmul.f32 %v572, %v572
        %v678 = vmul.f32 %v573, %v573
        %v679 = vmul.f32 %v574, %v574
        %v680 = vmul.f32 %v575, %v575
        %v681 = vmul.f32 %v576, %v576
        %v682 = vmul.f32 %v577, %v577
        %v683 = vmul.f32 %v578, %v578
        %v684 = vmul.f32 %v579, %v579
        %v685 = vmul.f32 %v580, %v580
        %v686 = vmul.f32 %v581, %v581
        %v687 = vmul.f32 %v582, %v582
        %v688 = vmul.f32 %v583, %v583
        %v689 = vmul.f32 %v584, %v584
        %v690 = vmul.f32 %v585, %v585
        %v691 = vmul.f32 %v586, %v586
        %v692 = vmul.f32 %v587, %v587
        %v693 = vmul.f32 %v588, %v588
        %v694 = vmul.f32 %v589, %v589
        %v695 = vmul.f32 %v590, %v590
        %v696 = vmul.f32 %v591, %v591
        %v697 = vmul.f32 %v592, %v592
        %v698 = vmul.f32 %v593, %v593
        %v699 = vmul.f32 %v594, %v594
        %v700 = vmul.f32 %v595, %v595
        %v701 = vmul.f32 %v596, %v596
        %v702 = vmul.f32 %v597, %v597
        %v703 = vmul.f32 %v598, %v598
        %v704 = vmul.f32 %v599, %v599
        %v705 = vmul.f32 %v600, %v600
        %v706 = vmul.f32 %v601, %v601
        %v707 = vmul.f32 %v602, %v602
        %v708 = vmul.f32 %v603, %v603
        %v709 = vmul.f32 %v604, %v604
        %v710 = vmul.f32 %v605, %v605
        %v711 = vmul.f32 %v606, %v606
        %v712 = vmul.f32 %v607, %v607
        %v713 = vmul.f32 %v608, %v608
        %v714 = vmul.f32 %v609, %v609
        %v715 = vmul.f32 %v610, %v610
        %v716 = vmul.f32 %v611, %v611
        %v717 = vmul.f32 %v612, %v612
        %v718 = vmul.f32 %v613, %v613
        %v719 = vmul.f32 %v614, %v614
        %v720 = vmul.f32 %v615, %v615
        %v721 = vmul.f32 %v616, %v616
        %v722 = vmul.f32 %v617, %v617
        %v723 = vmul.f32 %v618, %v618
        %v724 = vmul.f32 %v619, %v619
        %v725 = vmul.f32 %v620, %v620
        %v726 = vmul.f32 %v621, %v621
        %v727 = vmul.f32 %v622, %v622
        %v728 = vmul.f32 %v623, %v623
        %v729 = vadd.f32 %v624, %v639
        %v730 = vadd.f32 %v729, %v654
        %v731 = vadd.f32 %v730, %v669
        %v732 = vadd.f32 %v731, %v684
        %v733 = vadd.f32 %v732, %v699
        %v734 = vsel %vm313, %v714, 0.0
        %v735 = vadd.f32 %v733, %v734
        %v736 = vrot.slane %v735, 4
        %v737 = vadd.f32 %v735, %v736
        %v738 = vrot.slane %v737, 2
        %v739 = vadd.f32 %v737, %v738
        %v740 = vrot.slane %v739, 1
        %v741 = vadd.f32 %v739, %v740
        %v742 = vadd.f32 %v625, %v640
        %v743 = vadd.f32 %v742, %v655
        %v744 = vadd.f32 %v743, %v670
        %v745 = vadd.f32 %v744, %v685
        %v746 = vadd.f32 %v745, %v700
        %v747 = vsel %vm313, %v715, 0.0
        %v748 = vadd.f32 %v746, %v747
        %v749 = vrot.slane %v748, 4
        %v750 = vadd.f32 %v748, %v749
        %v751 = vrot.slane %v750, 2
        %v752 = vadd.f32 %v750, %v751
        %v753 = vrot.slane %v752, 1
        %v754 = vadd.f32 %v752, %v753
        %v755 = vadd.f32 %v626, %v641
        %v756 = vadd.f32 %v755, %v656
        %v757 = vadd.f32 %v756, %v671
        %v758 = vadd.f32 %v757, %v686
        %v759 = vadd.f32 %v758, %v701
        %v760 = vsel %vm313, %v716, 0.0
        %v761 = vadd.f32 %v759, %v760
        %v762 = vrot.slane %v761, 4
        %v763 = vadd.f32 %v761, %v762
        %v764 = vrot.slane %v763, 2
        %v765 = vadd.f32 %v763, %v764
        %v766 = vrot.slane %v765, 1
        %v767 = vadd.f32 %v765, %v766
        %v768 = vadd.f32 %v627, %v642
        %v769 = vadd.f32 %v768, %v657
        %v770 = vadd.f32 %v769, %v672
        %v771 = vadd.f32 %v770, %v687
        %v772 = vadd.f32 %v771, %v702
        %v773 = vsel %vm313, %v717, 0.0
        %v774 = vadd.f32 %v772, %v773
        %v775 = vrot.slane %v774, 4
        %v776 = vadd.f32 %v774, %v775
        %v777 = vrot.slane %v776, 2
        %v778 = vadd.f32 %v776, %v777
        %v779 = vrot.slane %v778, 1
        %v780 = vadd.f32 %v778, %v779
        %v781 = vadd.f32 %v628, %v643
        %v782 = vadd.f32 %v781, %v658
        %v783 = vadd.f32 %v782, %v673
        %v784 = vadd.f32 %v783, %v688
        %v785 = vadd.f32 %v784, %v703
        %v786 = vsel %vm313, %v718, 0.0
        %v787 = vadd.f32 %v785, %v786
        %v788 = vrot.slane %v787, 4
        %v789 = vadd.f32 %v787, %v788
        %v790 = vrot.slane %v789, 2
        %v791 = vadd.f32 %v789, %v790
        %v792 = vrot.slane %v791, 1
        %v793 = vadd.f32 %v791, %v792
        %v794 = vadd.f32 %v629, %v644
        %v795 = vadd.f32 %v794, %v659
        %v796 = vadd.f32 %v795, %v674
        %v797 = vadd.f32 %v796, %v689
        %v798 = vadd.f32 %v797, %v704
        %v799 = vsel %vm313, %v719, 0.0
        %v800 = vadd.f32 %v798, %v799
        %v801 = vrot.slane %v800, 4
        %v802 = vadd.f32 %v800, %v801
        %v803 = vrot.slane %v802, 2
        %v804 = vadd.f32 %v802, %v803
        %v805 = vrot.slane %v804, 1
        %v806 = vadd.f32 %v804, %v805
        %v807 = vadd.f32 %v630, %v645
        %v808 = vadd.f32 %v807, %v660
        %v809 = vadd.f32 %v808, %v675
        %v810 = vadd.f32 %v809, %v690
        %v811 = vadd.f32 %v810, %v705
        %v812 = vsel %vm313, %v720, 0.0
        %v813 = vadd.f32 %v811, %v812
        %v814 = vrot.slane %v813, 4
        %v815 = vadd.f32 %v813, %v814
        %v816 = vrot.slane %v815, 2
        %v817 = vadd.f32 %v815, %v816
        %v818 = vrot.slane %v817, 1
        %v819 = vadd.f32 %v817, %v818
        %v820 = vadd.f32 %v631, %v646
        %v821 = vadd.f32 %v820, %v661
        %v822 = vadd.f32 %v821, %v676
        %v823 = vadd.f32 %v822, %v691
        %v824 = vadd.f32 %v823, %v706
        %v825 = vsel %vm313, %v721, 0.0
        %v826 = vadd.f32 %v824, %v825
        %v827 = vrot.slane %v826, 4
        %v828 = vadd.f32 %v826, %v827
        %v829 = vrot.slane %v828, 2
        %v830 = vadd.f32 %v828, %v829
        %v831 = vrot.slane %v830, 1
        %v832 = vadd.f32 %v830, %v831
        %v833 = vadd.f32 %v632, %v647
        %v834 = vadd.f32 %v833, %v662
        %v835 = vadd.f32 %v834, %v677
        %v836 = vadd.f32 %v835, %v692
        %v837 = vadd.f32 %v836, %v707
        %v838 = vsel %vm313, %v722, 0.0
        %v839 = vadd.f32 %v837, %v838
        %v840 = vrot.slane %v839, 4
        %v841 = vadd.f32 %v839, %v840
        %v842 = vrot.slane %v841, 2
        %v843 = vadd.f32 %v841, %v842
        %v844 = vrot.slane %v843, 1
        %v845 = vadd.f32 %v843, %v844
        %v846 = vadd.f32 %v633, %v648
        %v847 = vadd.f32 %v846, %v663
        %v848 = vadd.f32 %v847, %v678
        %v849 = vadd.f32 %v848, %v693
        %v850 = vadd.f32 %v849, %v708
        %v851 = vsel %vm313, %v723, 0.0
        %v852 = vadd.f32 %v850, %v851
        %v853 = vrot.slane %v852, 4
        %v854 = vadd.f32 %v852, %v853
        %v855 = vrot.slane %v854, 2
        %v856 = vadd.f32 %v854, %v855
        %v857 = vrot.slane %v856, 1
        %v858 = vadd.f32 %v856, %v857
        %v859 = vadd.f32 %v634, %v649
        %v860 = vadd.f32 %v859, %v664
        %v861 = vadd.f32 %v860, %v679
        %v862 = vadd.f32 %v861, %v694
        %v863 = vadd.f32 %v862, %v709
        %v864 = vsel %vm313, %v724, 0.0
        %v865 = vadd.f32 %v863, %v864
        %v866 = vrot.slane %v865, 4
        %v867 = vadd.f32 %v865, %v866
        %v868 = vrot.slane %v867, 2
        %v869 = vadd.f32 %v867, %v868
        %v870 = vrot.slane %v869, 1
        %v871 = vadd.f32 %v869, %v870
        %v872 = vadd.f32 %v635, %v650
        %v873 = vadd.f32 %v872, %v665
        %v874 = vadd.f32 %v873, %v680
        %v875 = vadd.f32 %v874, %v695
        %v876 = vadd.f32 %v875, %v710
        %v877 = vsel %vm313, %v725, 0.0
        %v878 = vadd.f32 %v876, %v877
        %v879 = vrot.slane %v878, 4
        %v880 = vadd.f32 %v878, %v879
        %v881 = vrot.slane %v880, 2
        %v882 = vadd.f32 %v880, %v881
        %v883 = vrot.slane %v882, 1
        %v884 = vadd.f32 %v882, %v883
        %v885 = vadd.f32 %v636, %v651
        %v886 = vadd.f32 %v885, %v666
        %v887 = vadd.f32 %v886, %v681
        %v888 = vadd.f32 %v887, %v696
        %v889 = vadd.f32 %v888, %v711
        %v890 = vsel %vm313, %v726, 0.0
        %v891 = vadd.f32 %v889, %v890
        %v892 = vrot.slane %v891, 4
        %v893 = vadd.f32 %v891, %v892
        %v894 = vrot.slane %v893, 2
        %v895 = vadd.f32 %v893, %v894
        %v896 = vrot.slane %v895, 1
        %v897 = vadd.f32 %v895, %v896
        %v898 = vadd.f32 %v637, %v652
        %v899 = vadd.f32 %v898, %v667
        %v900 = vadd.f32 %v899, %v682
        %v901 = vadd.f32 %v900, %v697
        %v902 = vadd.f32 %v901, %v712
        %v903 = vsel %vm313, %v727, 0.0
        %v904 = vadd.f32 %v902, %v903
        %v905 = vrot.slane %v904, 4
        %v906 = vadd.f32 %v904, %v905
        %v907 = vrot.slane %v906, 2
        %v908 = vadd.f32 %v906, %v907
        %v909 = vrot.slane %v908, 1
        %v910 = vadd.f32 %v908, %v909
        %v911 = vadd.f32 %v638, %v653
        %v912 = vadd.f32 %v911, %v668
        %v913 = vadd.f32 %v912, %v683
        %v914 = vadd.f32 %v913, %v698
        %v915 = vadd.f32 %v914, %v713
        %v916 = vsel %vm313, %v728, 0.0
        %v917 = vadd.f32 %v915, %v916
        %v918 = vrot.slane %v917, 4
        %v919 = vadd.f32 %v917, %v918
        %v920 = vrot.slane %v919, 2
        %v921 = vadd.f32 %v919, %v920
        %v922 = vrot.slane %v921, 1
        %v923 = vadd.f32 %v921, %v922
        %v924 = vmul.f32 %v741, 0.020408163
        %v925 = vmul.f32 %v754, 0.020408163
        %v926 = vmul.f32 %v767, 0.020408163
        %v927 = vmul.f32 %v780, 0.020408163
        %v928 = vmul.f32 %v793, 0.020408163
        %v929 = vmul.f32 %v806, 0.020408163
        %v930 = vmul.f32 %v819, 0.020408163
        %v931 = vmul.f32 %v832, 0.020408163
        %v932 = vmul.f32 %v845, 0.020408163
        %v933 = vmul.f32 %v858, 0.020408163
        %v934 = vmul.f32 %v871, 0.020408163
        %v935 = vmul.f32 %v884, 0.020408163
        %v936 = vmul.f32 %v897, 0.020408163
        %v937 = vmul.f32 %v910, 0.020408163
        %v938 = vmul.f32 %v923, 0.020408163
        %v939 = vadd.f32 %v924, 0.001
        %v940 = vadd.f32 %v925, 0.001
        %v941 = vadd.f32 %v926, 0.001
        %v942 = vadd.f32 %v927, 0.001
        %v943 = vadd.f32 %v928, 0.001
        %v944 = vadd.f32 %v929, 0.001
        %v945 = vadd.f32 %v930, 0.001
        %v946 = vadd.f32 %v931, 0.001
        %v947 = vadd.f32 %v932, 0.001
        %v948 = vadd.f32 %v933, 0.001
        %v949 = vadd.f32 %v934, 0.001
        %v950 = vadd.f32 %v935, 0.001
        %v951 = vadd.f32 %v936, 0.001
        %v952 = vadd.f32 %v937, 0.001
        %v953 = vadd.f32 %v938, 0.001
        %v954 = vrsqrt.pop %v939
        %v955 = vrsqrt.pop %v940
        %v956 = vrsqrt.pop %v941
        %v957 = vrsqrt.pop %v942
        %v958 = vrsqrt.pop %v943
        %v959 = vrsqrt.pop %v944
        %v960 = vrsqrt.pop %v945
        %v961 = vrsqrt.pop %v946
        %v962 = vrsqrt.pop %v947
        %v963 = vrsqrt.pop %v948
        %v964 = vrsqrt.pop %v949
        %v965 = vrsqrt.pop %v950
        %v966 = vrsqrt.pop %v951
        %v967 = vrsqrt.pop %v952
        %v968 = vrsqrt.pop %v953
        %v969 = vld [vmem:[%s174] ss:$2 sm:$0xff]
        %s970 = scalar_lea.vmem %s174, 16 [#allocation5]
        %v971 = vld [vmem:[%s970] ss:$2 sm:$0xff]
        %s972 = scalar_lea.vmem %s174, 1 [#allocation5]
        %v973 = vld [vmem:[%s972] ss:$2 sm:$0xff]
        %s974 = scalar_lea.vmem %s174, 17 [#allocation5]
        %v975 = vld [vmem:[%s974] ss:$2 sm:$0xff]
        %v978 = vlaneseq
        %v979 = vshrl.u32 %v978, 7
        %v980 = vsub.s32 0, %v979
        %v981 = vrot.slane %v969, %v980
        %v982 = vlaneseq
        %v983 = vshrl.u32 %v982, 7
        %v984 = vsub.s32 1, %v983
        %v985 = vrot.slane %v969, %v984
        %v986 = vlaneseq
        %v987 = vshrl.u32 %v986, 7
        %v988 = vsub.s32 2, %v987
        %v989 = vrot.slane %v969, %v988
        %v990 = vlaneseq
        %v991 = vshrl.u32 %v990, 7
        %v992 = vsub.s32 3, %v991
        %v993 = vrot.slane %v969, %v992
        %v994 = vlaneseq
        %v995 = vshrl.u32 %v994, 7
        %v996 = vsub.s32 4, %v995
        %v997 = vrot.slane %v969, %v996
        %v998 = vlaneseq
        %v999 = vshrl.u32 %v998, 7
        %v1000 = vsub.s32 5, %v999
        %v1001 = vrot.slane %v969, %v1000
        %v1002 = vlaneseq
        %v1003 = vshrl.u32 %v1002, 7
        %v1004 = vsub.s32 6, %v1003
        %v1005 = vrot.slane %v969, %v1004
        %v1006 = vlaneseq
        %v1007 = vshrl.u32 %v1006, 7
        %v1008 = vsub.s32 7, %v1007
        %v1009 = vrot.slane %v969, %v1008
        %v1010 = vlaneseq
        %v1011 = vshrl.u32 %v1010, 7
        %v1012 = vsub.s32 0, %v1011
        %v1013 = vrot.slane %v971, %v1012
        %v1014 = vlaneseq
        %v1015 = vshrl.u32 %v1014, 7
        %v1016 = vsub.s32 1, %v1015
        %v1017 = vrot.slane %v971, %v1016
        %v1018 = vlaneseq
        %v1019 = vshrl.u32 %v1018, 7
        %v1020 = vsub.s32 2, %v1019
        %v1021 = vrot.slane %v971, %v1020
        %v1022 = vlaneseq
        %v1023 = vshrl.u32 %v1022, 7
        %v1024 = vsub.s32 3, %v1023
        %v1025 = vrot.slane %v971, %v1024
        %v1026 = vlaneseq
        %v1027 = vshrl.u32 %v1026, 7
        %v1028 = vsub.s32 4, %v1027
        %v1029 = vrot.slane %v971, %v1028
        %v1030 = vlaneseq
        %v1031 = vshrl.u32 %v1030, 7
        %v1032 = vsub.s32 5, %v1031
        %v1033 = vrot.slane %v971, %v1032
        %v1034 = vlaneseq
        %v1035 = vshrl.u32 %v1034, 7
        %v1036 = vsub.s32 6, %v1035
        %v1037 = vrot.slane %v971, %v1036
        %v1053 = vmul.f32 %v954, %v981
        %v1054 = vmul.f32 %v955, %v985
        %v1055 = vmul.f32 %v956, %v989
        %v1056 = vmul.f32 %v957, %v993
        %v1057 = vmul.f32 %v958, %v997
        %v1058 = vmul.f32 %v959, %v1001
        %v1059 = vmul.f32 %v960, %v1005
        %v1060 = vmul.f32 %v961, %v1009
        %v1061 = vmul.f32 %v962, %v1013
        %v1062 = vmul.f32 %v963, %v1017
        %v1063 = vmul.f32 %v964, %v1021
        %v1064 = vmul.f32 %v965, %v1025
        %v1065 = vmul.f32 %v966, %v1029
        %v1066 = vmul.f32 %v967, %v1033
        %v1067 = vmul.f32 %v968, %v1037
        %v1068 = vlaneseq
        %v1069 = vshrl.u32 %v1068, 7
        %v1070 = vsub.s32 0, %v1069
        %v1071 = vrot.slane %v1053, %v1070
        %v1072 = vlaneseq
        %v1073 = vshrl.u32 %v1072, 7
        %v1074 = vsub.s32 0, %v1073
        %v1075 = vrot.slane %v1054, %v1074
        %v1076 = vlaneseq
        %v1077 = vshrl.u32 %v1076, 7
        %v1078 = vsub.s32 0, %v1077
        %v1079 = vrot.slane %v1055, %v1078
        %v1080 = vlaneseq
        %v1081 = vshrl.u32 %v1080, 7
        %v1082 = vsub.s32 0, %v1081
        %v1083 = vrot.slane %v1056, %v1082
        %v1084 = vlaneseq
        %v1085 = vshrl.u32 %v1084, 7
        %v1086 = vsub.s32 0, %v1085
        %v1087 = vrot.slane %v1057, %v1086
        %v1088 = vlaneseq
        %v1089 = vshrl.u32 %v1088, 7
        %v1090 = vsub.s32 0, %v1089
        %v1091 = vrot.slane %v1058, %v1090
        %v1092 = vlaneseq
        %v1093 = vshrl.u32 %v1092, 7
        %v1094 = vsub.s32 0, %v1093
        %v1095 = vrot.slane %v1059, %v1094
        %v1096 = vlaneseq
        %v1097 = vshrl.u32 %v1096, 7
        %v1098 = vsub.s32 0, %v1097
        %v1099 = vrot.slane %v1060, %v1098
        %v1100 = vlaneseq
        %v1101 = vshrl.u32 %v1100, 7
        %v1102 = vsub.s32 0, %v1101
        %v1103 = vrot.slane %v1061, %v1102
        %v1104 = vlaneseq
        %v1105 = vshrl.u32 %v1104, 7
        %v1106 = vsub.s32 0, %v1105
        %v1107 = vrot.slane %v1062, %v1106
        %v1108 = vlaneseq
        %v1109 = vshrl.u32 %v1108, 7
        %v1110 = vsub.s32 0, %v1109
        %v1111 = vrot.slane %v1063, %v1110
        %v1112 = vlaneseq
        %v1113 = vshrl.u32 %v1112, 7
        %v1114 = vsub.s32 0, %v1113
        %v1115 = vrot.slane %v1064, %v1114
        %v1116 = vlaneseq
        %v1117 = vshrl.u32 %v1116, 7
        %v1118 = vsub.s32 0, %v1117
        %v1119 = vrot.slane %v1065, %v1118
        %v1120 = vlaneseq
        %v1121 = vshrl.u32 %v1120, 7
        %v1122 = vsub.s32 0, %v1121
        %v1123 = vrot.slane %v1066, %v1122
        %v1124 = vlaneseq
        %v1125 = vshrl.u32 %v1124, 7
        %v1126 = vsub.s32 0, %v1125
        %v1127 = vrot.slane %v1067, %v1126
        %v1128 = vmul.f32 %v519, %v1071
        %v1129 = vmul.f32 %v520, %v1075
        %v1130 = vmul.f32 %v521, %v1079
        %v1131 = vmul.f32 %v522, %v1083
        %v1132 = vmul.f32 %v523, %v1087
        %v1133 = vmul.f32 %v524, %v1091
        %v1134 = vmul.f32 %v525, %v1095
        %v1135 = vmul.f32 %v526, %v1099
        %v1136 = vmul.f32 %v527, %v1103
        %v1137 = vmul.f32 %v528, %v1107
        %v1138 = vmul.f32 %v529, %v1111
        %v1139 = vmul.f32 %v530, %v1115
        %v1140 = vmul.f32 %v531, %v1119
        %v1141 = vmul.f32 %v532, %v1123
        %v1142 = vmul.f32 %v533, %v1127
        %v1143 = vmul.f32 %v534, %v1071
        %v1144 = vmul.f32 %v535, %v1075
        %v1145 = vmul.f32 %v536, %v1079
        %v1146 = vmul.f32 %v537, %v1083
        %v1147 = vmul.f32 %v538, %v1087
        %v1148 = vmul.f32 %v539, %v1091
        %v1149 = vmul.f32 %v540, %v1095
        %v1150 = vmul.f32 %v541, %v1099
        %v1151 = vmul.f32 %v542, %v1103
        %v1152 = vmul.f32 %v543, %v1107
        %v1153 = vmul.f32 %v544, %v1111
        %v1154 = vmul.f32 %v545, %v1115
        %v1155 = vmul.f32 %v546, %v1119
        %v1156 = vmul.f32 %v547, %v1123
        %v1157 = vmul.f32 %v548, %v1127
        %v1158 = vmul.f32 %v549, %v1071
        %v1159 = vmul.f32 %v550, %v1075
        %v1160 = vmul.f32 %v551, %v1079
        %v1161 = vmul.f32 %v552, %v1083
        %v1162 = vmul.f32 %v553, %v1087
        %v1163 = vmul.f32 %v554, %v1091
        %v1164 = vmul.f32 %v555, %v1095
        %v1165 = vmul.f32 %v556, %v1099
        %v1166 = vmul.f32 %v557, %v1103
        %v1167 = vmul.f32 %v558, %v1107
        %v1168 = vmul.f32 %v559, %v1111
        %v1169 = vmul.f32 %v560, %v1115
        %v1170 = vmul.f32 %v561, %v1119
        %v1171 = vmul.f32 %v562, %v1123
        %v1172 = vmul.f32 %v563, %v1127
        %v1173 = vmul.f32 %v564, %v1071
        %v1174 = vmul.f32 %v565, %v1075
        %v1175 = vmul.f32 %v566, %v1079
        %v1176 = vmul.f32 %v567, %v1083
        %v1177 = vmul.f32 %v568, %v1087
        %v1178 = vmul.f32 %v569, %v1091
        %v1179 = vmul.f32 %v570, %v1095
        %v1180 = vmul.f32 %v571, %v1099
        %v1181 = vmul.f32 %v572, %v1103
        %v1182 = vmul.f32 %v573, %v1107
        %v1183 = vmul.f32 %v574, %v1111
        %v1184 = vmul.f32 %v575, %v1115
        %v1185 = vmul.f32 %v576, %v1119
        %v1186 = vmul.f32 %v577, %v1123
        %v1187 = vmul.f32 %v578, %v1127
        %v1188 = vmul.f32 %v579, %v1071
        %v1189 = vmul.f32 %v580, %v1075
        %v1190 = vmul.f32 %v581, %v1079
        %v1191 = vmul.f32 %v582, %v1083
        %v1192 = vmul.f32 %v583, %v1087
        %v1193 = vmul.f32 %v584, %v1091
        %v1194 = vmul.f32 %v585, %v1095
        %v1195 = vmul.f32 %v586, %v1099
        %v1196 = vmul.f32 %v587, %v1103
        %v1197 = vmul.f32 %v588, %v1107
        %v1198 = vmul.f32 %v589, %v1111
        %v1199 = vmul.f32 %v590, %v1115
        %v1200 = vmul.f32 %v591, %v1119
        %v1201 = vmul.f32 %v592, %v1123
        %v1202 = vmul.f32 %v593, %v1127
        %v1203 = vmul.f32 %v594, %v1071
        %v1204 = vmul.f32 %v595, %v1075
        %v1205 = vmul.f32 %v596, %v1079
        %v1206 = vmul.f32 %v597, %v1083
        %v1207 = vmul.f32 %v598, %v1087
        %v1208 = vmul.f32 %v599, %v1091
        %v1209 = vmul.f32 %v600, %v1095
        %v1210 = vmul.f32 %v601, %v1099
        %v1211 = vmul.f32 %v602, %v1103
        %v1212 = vmul.f32 %v603, %v1107
        %v1213 = vmul.f32 %v604, %v1111
        %v1214 = vmul.f32 %v605, %v1115
        %v1215 = vmul.f32 %v606, %v1119
        %v1216 = vmul.f32 %v607, %v1123
        %v1217 = vmul.f32 %v608, %v1127
        %v1218 = vmul.f32 %v609, %v1071
        %v1219 = vmul.f32 %v610, %v1075
        %v1220 = vmul.f32 %v611, %v1079
        %v1221 = vmul.f32 %v612, %v1083
        %v1222 = vmul.f32 %v613, %v1087
        %v1223 = vmul.f32 %v614, %v1091
        %v1224 = vmul.f32 %v615, %v1095
        %v1225 = vmul.f32 %v616, %v1099
        %v1226 = vmul.f32 %v617, %v1103
        %v1227 = vmul.f32 %v618, %v1107
        %v1228 = vmul.f32 %v619, %v1111
        %v1229 = vmul.f32 %v620, %v1115
        %v1230 = vmul.f32 %v621, %v1119
        %v1231 = vmul.f32 %v622, %v1123
        %v1232 = vmul.f32 %v623, %v1127
        %v1235 = vlaneseq
        %v1236 = vshrl.u32 %v1235, 7
        %v1237 = vsub.s32 0, %v1236
        %v1238 = vrot.slane %v973, %v1237
        %v1239 = vlaneseq
        %v1240 = vshrl.u32 %v1239, 7
        %v1241 = vsub.s32 1, %v1240
        %v1242 = vrot.slane %v973, %v1241
        %v1243 = vlaneseq
        %v1244 = vshrl.u32 %v1243, 7
        %v1245 = vsub.s32 2, %v1244
        %v1246 = vrot.slane %v973, %v1245
        %v1247 = vlaneseq
        %v1248 = vshrl.u32 %v1247, 7
        %v1249 = vsub.s32 3, %v1248
        %v1250 = vrot.slane %v973, %v1249
        %v1251 = vlaneseq
        %v1252 = vshrl.u32 %v1251, 7
        %v1253 = vsub.s32 4, %v1252
        %v1254 = vrot.slane %v973, %v1253
        %v1255 = vlaneseq
        %v1256 = vshrl.u32 %v1255, 7
        %v1257 = vsub.s32 5, %v1256
        %v1258 = vrot.slane %v973, %v1257
        %v1259 = vlaneseq
        %v1260 = vshrl.u32 %v1259, 7
        %v1261 = vsub.s32 6, %v1260
        %v1262 = vrot.slane %v973, %v1261
        %v1263 = vlaneseq
        %v1264 = vshrl.u32 %v1263, 7
        %v1265 = vsub.s32 7, %v1264
        %v1266 = vrot.slane %v973, %v1265
        %v1267 = vlaneseq
        %v1268 = vshrl.u32 %v1267, 7
        %v1269 = vsub.s32 0, %v1268
        %v1270 = vrot.slane %v975, %v1269
        %v1271 = vlaneseq
        %v1272 = vshrl.u32 %v1271, 7
        %v1273 = vsub.s32 1, %v1272
        %v1274 = vrot.slane %v975, %v1273
        %v1275 = vlaneseq
        %v1276 = vshrl.u32 %v1275, 7
        %v1277 = vsub.s32 2, %v1276
        %v1278 = vrot.slane %v975, %v1277
        %v1279 = vlaneseq
        %v1280 = vshrl.u32 %v1279, 7
        %v1281 = vsub.s32 3, %v1280
        %v1282 = vrot.slane %v975, %v1281
        %v1283 = vlaneseq
        %v1284 = vshrl.u32 %v1283, 7
        %v1285 = vsub.s32 4, %v1284
        %v1286 = vrot.slane %v975, %v1285
        %v1287 = vlaneseq
        %v1288 = vshrl.u32 %v1287, 7
        %v1289 = vsub.s32 5, %v1288
        %v1290 = vrot.slane %v975, %v1289
        %v1291 = vlaneseq
        %v1292 = vshrl.u32 %v1291, 7
        %v1293 = vsub.s32 6, %v1292
        %v1294 = vrot.slane %v975, %v1293
        %v1310 = vadd.f32 %v1128, %v1238
        %v1311 = vadd.f32 %v1129, %v1242
        %v1312 = vadd.f32 %v1130, %v1246
        %v1313 = vadd.f32 %v1131, %v1250
        %v1314 = vadd.f32 %v1132, %v1254
        %v1315 = vadd.f32 %v1133, %v1258
        %v1316 = vadd.f32 %v1134, %v1262
        %v1317 = vadd.f32 %v1135, %v1266
        %v1318 = vadd.f32 %v1136, %v1270
        %v1319 = vadd.f32 %v1137, %v1274
        %v1320 = vadd.f32 %v1138, %v1278
        %v1321 = vadd.f32 %v1139, %v1282
        %v1322 = vadd.f32 %v1140, %v1286
        %v1323 = vadd.f32 %v1141, %v1290
        %v1324 = vadd.f32 %v1142, %v1294
        %v1325 = vadd.f32 %v1143, %v1238
        %v1326 = vadd.f32 %v1144, %v1242
        %v1327 = vadd.f32 %v1145, %v1246
        %v1328 = vadd.f32 %v1146, %v1250
        %v1329 = vadd.f32 %v1147, %v1254
        %v1330 = vadd.f32 %v1148, %v1258
        %v1331 = vadd.f32 %v1149, %v1262
        %v1332 = vadd.f32 %v1150, %v1266
        %v1333 = vadd.f32 %v1151, %v1270
        %v1334 = vadd.f32 %v1152, %v1274
        %v1335 = vadd.f32 %v1153, %v1278
        %v1336 = vadd.f32 %v1154, %v1282
        %v1337 = vadd.f32 %v1155, %v1286
        %v1338 = vadd.f32 %v1156, %v1290
        %v1339 = vadd.f32 %v1157, %v1294
        %v1340 = vadd.f32 %v1158, %v1238
        %v1341 = vadd.f32 %v1159, %v1242
        %v1342 = vadd.f32 %v1160, %v1246
        %v1343 = vadd.f32 %v1161, %v1250
        %v1344 = vadd.f32 %v1162, %v1254
        %v1345 = vadd.f32 %v1163, %v1258
        %v1346 = vadd.f32 %v1164, %v1262
        %v1347 = vadd.f32 %v1165, %v1266
        %v1348 = vadd.f32 %v1166, %v1270
        %v1349 = vadd.f32 %v1167, %v1274
        %v1350 = vadd.f32 %v1168, %v1278
        %v1351 = vadd.f32 %v1169, %v1282
        %v1352 = vadd.f32 %v1170, %v1286
        %v1353 = vadd.f32 %v1171, %v1290
        %v1354 = vadd.f32 %v1172, %v1294
        %v1355 = vadd.f32 %v1173, %v1238
        %v1356 = vadd.f32 %v1174, %v1242
        %v1357 = vadd.f32 %v1175, %v1246
        %v1358 = vadd.f32 %v1176, %v1250
        %v1359 = vadd.f32 %v1177, %v1254
        %v1360 = vadd.f32 %v1178, %v1258
        %v1361 = vadd.f32 %v1179, %v1262
        %v1362 = vadd.f32 %v1180, %v1266
        %v1363 = vadd.f32 %v1181, %v1270
        %v1364 = vadd.f32 %v1182, %v1274
        %v1365 = vadd.f32 %v1183, %v1278
        %v1366 = vadd.f32 %v1184, %v1282
        %v1367 = vadd.f32 %v1185, %v1286
        %v1368 = vadd.f32 %v1186, %v1290
        %v1369 = vadd.f32 %v1187, %v1294
        %v1370 = vadd.f32 %v1188, %v1238
        %v1371 = vadd.f32 %v1189, %v1242
        %v1372 = vadd.f32 %v1190, %v1246
        %v1373 = vadd.f32 %v1191, %v1250
        %v1374 = vadd.f32 %v1192, %v1254
        %v1375 = vadd.f32 %v1193, %v1258
        %v1376 = vadd.f32 %v1194, %v1262
        %v1377 = vadd.f32 %v1195, %v1266
        %v1378 = vadd.f32 %v1196, %v1270
        %v1379 = vadd.f32 %v1197, %v1274
        %v1380 = vadd.f32 %v1198, %v1278
        %v1381 = vadd.f32 %v1199, %v1282
        %v1382 = vadd.f32 %v1200, %v1286
        %v1383 = vadd.f32 %v1201, %v1290
        %v1384 = vadd.f32 %v1202, %v1294
        %v1385 = vadd.f32 %v1203, %v1238
        %v1386 = vadd.f32 %v1204, %v1242
        %v1387 = vadd.f32 %v1205, %v1246
        %v1388 = vadd.f32 %v1206, %v1250
        %v1389 = vadd.f32 %v1207, %v1254
        %v1390 = vadd.f32 %v1208, %v1258
        %v1391 = vadd.f32 %v1209, %v1262
        %v1392 = vadd.f32 %v1210, %v1266
        %v1393 = vadd.f32 %v1211, %v1270
        %v1394 = vadd.f32 %v1212, %v1274
        %v1395 = vadd.f32 %v1213, %v1278
        %v1396 = vadd.f32 %v1214, %v1282
        %v1397 = vadd.f32 %v1215, %v1286
        %v1398 = vadd.f32 %v1216, %v1290
        %v1399 = vadd.f32 %v1217, %v1294
        %v1400 = vadd.f32 %v1218, %v1238
        %v1401 = vadd.f32 %v1219, %v1242
        %v1402 = vadd.f32 %v1220, %v1246
        %v1403 = vadd.f32 %v1221, %v1250
        %v1404 = vadd.f32 %v1222, %v1254
        %v1405 = vadd.f32 %v1223, %v1258
        %v1406 = vadd.f32 %v1224, %v1262
        %v1407 = vadd.f32 %v1225, %v1266
        %v1408 = vadd.f32 %v1226, %v1270
        %v1409 = vadd.f32 %v1227, %v1274
        %v1410 = vadd.f32 %v1228, %v1278
        %v1411 = vadd.f32 %v1229, %v1282
        %v1412 = vadd.f32 %v1230, %v1286
        %v1413 = vadd.f32 %v1231, %v1290
        %v1414 = vadd.f32 %v1232, %v1294
        %1415 = vst [vmem:[%s199] sm:$0xff] %v1310
        %1416 = vst [vmem:[%s199 + $0x8] sm:$0xff] %v1311
        %1417 = vst [vmem:[%s199 + $0x10] sm:$0xff] %v1312
        %1418 = vst [vmem:[%s199 + $0x18] sm:$0xff] %v1313
        %1419 = vst [vmem:[%s199 + $0x20] sm:$0xff] %v1314
        %1420 = vst [vmem:[%s199 + $0x28] sm:$0xff] %v1315
        %1421 = vst [vmem:[%s199 + $0x30] sm:$0xff] %v1316
        %1422 = vst [vmem:[%s199 + $0x38] sm:$0xff] %v1317
        %1423 = vst [vmem:[%s199 + $0x40] sm:$0xff] %v1318
        %1424 = vst [vmem:[%s199 + $0x48] sm:$0xff] %v1319
        %1425 = vst [vmem:[%s199 + $0x50] sm:$0xff] %v1320
        %1426 = vst [vmem:[%s199 + $0x58] sm:$0xff] %v1321
        %1427 = vst [vmem:[%s199 + $0x60] sm:$0xff] %v1322
        %1428 = vst [vmem:[%s199 + $0x68] sm:$0xff] %v1323
        %1429 = vst [vmem:[%s199 + $0x70] sm:$0xff] %v1324
        %1430 = vst [vmem:[%s199 + $0x78] sm:$0xff] %v1325
        %1431 = vst [vmem:[%s199 + $0x80] sm:$0xff] %v1326
        %1432 = vst [vmem:[%s199 + $0x88] sm:$0xff] %v1327
        %1433 = vst [vmem:[%s199 + $0x90] sm:$0xff] %v1328
        %1434 = vst [vmem:[%s199 + $0x98] sm:$0xff] %v1329
        %1435 = vst [vmem:[%s199 + $0xa0] sm:$0xff] %v1330
        %1436 = vst [vmem:[%s199 + $0xa8] sm:$0xff] %v1331
        %1437 = vst [vmem:[%s199 + $0xb0] sm:$0xff] %v1332
        %1438 = vst [vmem:[%s199 + $0xb8] sm:$0xff] %v1333
        %1439 = vst [vmem:[%s199 + $0xc0] sm:$0xff] %v1334
        %1440 = vst [vmem:[%s199 + $0xc8] sm:$0xff] %v1335
        %1441 = vst [vmem:[%s199 + $0xd0] sm:$0xff] %v1336
        %1442 = vst [vmem:[%s199 + $0xd8] sm:$0xff] %v1337
        %1443 = vst [vmem:[%s199 + $0xe0] sm:$0xff] %v1338
        %1444 = vst [vmem:[%s199 + $0xe8] sm:$0xff] %v1339
        %1445 = vst [vmem:[%s199 + $0xf0] sm:$0xff] %v1340
        %1446 = vst [vmem:[%s199 + $0xf8] sm:$0xff] %v1341
        %1447 = vst [vmem:[%s199 + $0x100] sm:$0xff] %v1342
        %1448 = vst [vmem:[%s199 + $0x108] sm:$0xff] %v1343
        %1449 = vst [vmem:[%s199 + $0x110] sm:$0xff] %v1344
        %1450 = vst [vmem:[%s199 + $0x118] sm:$0xff] %v1345
        %1451 = vst [vmem:[%s199 + $0x120] sm:$0xff] %v1346
        %1452 = vst [vmem:[%s199 + $0x128] sm:$0xff] %v1347
        %1453 = vst [vmem:[%s199 + $0x130] sm:$0xff] %v1348
        %1454 = vst [vmem:[%s199 + $0x138] sm:$0xff] %v1349
        %1455 = vst [vmem:[%s199 + $0x140] sm:$0xff] %v1350
        %1456 = vst [vmem:[%s199 + $0x148] sm:$0xff] %v1351
        %1457 = vst [vmem:[%s199 + $0x150] sm:$0xff] %v1352
        %1458 = vst [vmem:[%s199 + $0x158] sm:$0xff] %v1353
        %1459 = vst [vmem:[%s199 + $0x160] sm:$0xff] %v1354
        %1460 = vst [vmem:[%s199 + $0x168] sm:$0xff] %v1355
        %1461 = vst [vmem:[%s199 + $0x170] sm:$0xff] %v1356
        %1462 = vst [vmem:[%s199 + $0x178] sm:$0xff] %v1357
        %1463 = vst [vmem:[%s199 + $0x180] sm:$0xff] %v1358
        %1464 = vst [vmem:[%s199 + $0x188] sm:$0xff] %v1359
        %1465 = vst [vmem:[%s199 + $0x190] sm:$0xff] %v1360
        %1466 = vst [vmem:[%s199 + $0x198] sm:$0xff] %v1361
        %1467 = vst [vmem:[%s199 + $0x1a0] sm:$0xff] %v1362
        %1468 = vst [vmem:[%s199 + $0x1a8] sm:$0xff] %v1363
        %1469 = vst [vmem:[%s199 + $0x1b0] sm:$0xff] %v1364
        %1470 = vst [vmem:[%s199 + $0x1b8] sm:$0xff] %v1365
        %1471 = vst [vmem:[%s199 + $0x1c0] sm:$0xff] %v1366
        %1472 = vst [vmem:[%s199 + $0x1c8] sm:$0xff] %v1367
        %1473 = vst [vmem:[%s199 + $0x1d0] sm:$0xff] %v1368
        %1474 = vst [vmem:[%s199 + $0x1d8] sm:$0xff] %v1369
        %1475 = vst [vmem:[%s199 + $0x1e0] sm:$0xff] %v1370
        %1476 = vst [vmem:[%s199 + $0x1e8] sm:$0xff] %v1371
        %1477 = vst [vmem:[%s199 + $0x1f0] sm:$0xff] %v1372
        %1478 = vst [vmem:[%s199 + $0x1f8] sm:$0xff] %v1373
        %1479 = vst [vmem:[%s199 + $0x200] sm:$0xff] %v1374
        %1480 = vst [vmem:[%s199 + $0x208] sm:$0xff] %v1375
        %1481 = vst [vmem:[%s199 + $0x210] sm:$0xff] %v1376
        %1482 = vst [vmem:[%s199 + $0x218] sm:$0xff] %v1377
        %1483 = vst [vmem:[%s199 + $0x220] sm:$0xff] %v1378
        %1484 = vst [vmem:[%s199 + $0x228] sm:$0xff] %v1379
        %1485 = vst [vmem:[%s199 + $0x230] sm:$0xff] %v1380
        %1486 = vst [vmem:[%s199 + $0x238] sm:$0xff] %v1381
        %1487 = vst [vmem:[%s199 + $0x240] sm:$0xff] %v1382
        %1488 = vst [vmem:[%s199 + $0x248] sm:$0xff] %v1383
        %1489 = vst [vmem:[%s199 + $0x250] sm:$0xff] %v1384
        %1490 = vst [vmem:[%s199 + $0x258] sm:$0xff] %v1385
        %1491 = vst [vmem:[%s199 + $0x260] sm:$0xff] %v1386
        %1492 = vst [vmem:[%s199 + $0x268] sm:$0xff] %v1387
        %1493 = vst [vmem:[%s199 + $0x270] sm:$0xff] %v1388
        %1494 = vst [vmem:[%s199 + $0x278] sm:$0xff] %v1389
        %1495 = vst [vmem:[%s199 + $0x280] sm:$0xff] %v1390
        %1496 = vst [vmem:[%s199 + $0x288] sm:$0xff] %v1391
        %1497 = vst [vmem:[%s199 + $0x290] sm:$0xff] %v1392
        %1498 = vst [vmem:[%s199 + $0x298] sm:$0xff] %v1393
        %1499 = vst [vmem:[%s199 + $0x2a0] sm:$0xff] %v1394
        %1500 = vst [vmem:[%s199 + $0x2a8] sm:$0xff] %v1395
        %1501 = vst [vmem:[%s199 + $0x2b0] sm:$0xff] %v1396
        %1502 = vst [vmem:[%s199 + $0x2b8] sm:$0xff] %v1397
        %1503 = vst [vmem:[%s199 + $0x2c0] sm:$0xff] %v1398
        %1504 = vst [vmem:[%s199 + $0x2c8] sm:$0xff] %v1399
        %1505 = vst [vmem:[%s199 + $0x2d0] sm:$0x1] %v1400
        %1506 = vst [vmem:[%s199 + $0x2d8] sm:$0x1] %v1401
        %1507 = vst [vmem:[%s199 + $0x2e0] sm:$0x1] %v1402
        %1508 = vst [vmem:[%s199 + $0x2e8] sm:$0x1] %v1403
        %1509 = vst [vmem:[%s199 + $0x2f0] sm:$0x1] %v1404
        %1510 = vst [vmem:[%s199 + $0x2f8] sm:$0x1] %v1405
        %1511 = vst [vmem:[%s199 + $0x300] sm:$0x1] %v1406
        %1512 = vst [vmem:[%s199 + $0x308] sm:$0x1] %v1407
        %1513 = vst [vmem:[%s199 + $0x310] sm:$0x1] %v1408
        %1514 = vst [vmem:[%s199 + $0x318] sm:$0x1] %v1409
        %1515 = vst [vmem:[%s199 + $0x320] sm:$0x1] %v1410
        %1516 = vst [vmem:[%s199 + $0x328] sm:$0x1] %v1411
        %1517 = vst [vmem:[%s199 + $0x330] sm:$0x1] %v1412
        %1518 = vst [vmem:[%s199 + $0x338] sm:$0x1] %v1413
        %1519 = vst [vmem:[%s199 + $0x340] sm:$0x1] %v1414
        %s1520 = sand.u32 %s82, 1
        %s1521 = scalar_lea.sflag [#allocation4], %s1520
        %s1522 = sand.u32 %s82, 1
        %s1523 = smul.addr %s1522, 840
        %s1524 = scalar_lea.vmem [#allocation7], %s1523
        // Predicated region
        $region37: #{tpu_custom_call.1} parent=27 // pred_check
          %p1525 = pneg %p92
        $region38: #{tpu_custom_call.1} parent=27 // pred_check_branch
          %1527 = sbr.rel (%p1525) target = $region40
        $region39: #{tpu_custom_call.1} parent=27 // pred_region
          %s1528 = smul.u32 15, %s22
          %s1530 = ssub.s32 13440, 13440
          %1531 = vsyncadd %s1521, %s1530
          %s1532 = smul.addr %s1528, 128
          %s1533 = scalar_lea.hbm %s2, %s1532
          %s1534 = sshll.u32 %s1524, 4
          %s1535 = int_to_ptr.vmem [resolvable:$true] %s1534
          %1540 = dma.vmem_to_hbm [thread:$0]  %s1535, 13440, %s1533, %s1521, 1920, 3840, 120
        $region40: #{tpu_custom_call.1} parent=27 // pred_fallthru
          _
      $region28: #{tpu_custom_call.1} parent=5 // pred_fallthru
        _
      %p1541 = scmp.le.s32.totalorder 2, %s17
      // Predicated region
      $region41: #{tpu_custom_call.1} parent=5 // pred_check
        %p1542 = pneg %p1541
      $region42: #{tpu_custom_call.1} parent=5 // pred_check_branch
        %1544 = sbr.rel (%p1542) target = $region44
      $region43: #{tpu_custom_call.1} parent=5 // pred_region
        %s1545 = ssub.s32 %s17, 2
        // Predicated region
        $region45: #{tpu_custom_call.1} parent=43 // pred_check
          %p1546 = pneg %p98
        $region46: #{tpu_custom_call.1} parent=43 // pred_check_branch
          %1548 = sbr.rel (%p1546) target = $region48
        $region47: #{tpu_custom_call.1} parent=43 // pred_region
          %s1549 = sand.u32 %s83, 1
          %s1550 = scalar_lea.sflag [#allocation4], %s1549
          %s1551 = sand.u32 %s83, 1
          %s1552 = smul.addr %s1551, 840
          %s1553 = scalar_lea.vmem [#allocation7], %s1552
          %1554 = dma.done %s1550, 13440
        $region48: #{tpu_custom_call.1} parent=43 // pred_fallthru
          _
      $region44: #{tpu_custom_call.1} parent=5 // pred_fallthru
        _
    $region6: #{tpu_custom_call.1} parent=1 // loop_footer
      %s21 = sadd.s32 1, %s17
    $region7: #{tpu_custom_call.1} parent=1 // loop_footer_branch
      %16 = sbr.rel target = $region3
    $region8: #{tpu_custom_call.1} parent=1 // loop_exit
      _
    %1555 = vsyncpa [#allocation3], 1
    %s1556 = scalar_lea.sflag [#allocation3], 1
    %1557 = vsyncpa %s1556, 1
    %1558 = vsyncpa [#allocation6], 1
    %s1559 = scalar_lea.sflag [#allocation6], 1
    %1560 = vsyncpa %s1559, 1
    %1561 = vsyncpa [#allocation4], 1
    %s1562 = scalar_lea.sflag [#allocation4], 1
    %1563 = vsyncpa %s1562, 1

</llo_original>
